<compile_context>
chip_gen: v7x
topology: tpu7x:2x2x1
jax: 0.10.0
libtpu: 0.0.40
codegen_flags: <defaults>
</compile_context>

<pallas_src>
import functools

import jax
import jax.numpy as jnp
from jax.experimental import pallas as pl
from jax.experimental.pallas import tpu as pltpu


# ----------------------------------------------------------------------------
# Fused kernel:
#   tensor_b[b, 4p+0] = cos(|aa_p|/2)
#   tensor_b[b, 4p+k] = aa_p[k-1] * sin(|aa_p|/2)/|aa_p|   (k = 1..3, pytorch3d)
#   tensor_b[b, 4P..] = betas[b, :S]
#   out[b, m*D+d]     = (A[m, d] * W[m, d]) * tensor_b[b, d]   via tensor_b @ G
# ----------------------------------------------------------------------------
def _fused_kernel(raw_ref, sq_ref, g_ref, out_ref, *, num_pose):
    """raw/sq: (TB, D); g: (D, M*D); out: (TB, M*D)."""
    raw = raw_ref[...]   # (TB, D): [1, x, y, z] per part on pose lanes, betas after
    sq = sq_ref[...]     # (TB, D): |aa_p|^2 on pose lanes, 0 on beta lanes

    lane = jax.lax.broadcasted_iota(jnp.int32, raw.shape, 1)
    is_pose = lane < num_pose
    is_w = jnp.logical_and(is_pose, (lane & 3) == 0)

    # pytorch3d axis_angle_to_quaternion math, fully vectorized over lanes.
    angle = jnp.sqrt(sq)
    half = 0.5 * angle
    small = angle < jnp.float32(1e-6)
    safe = jnp.where(small, jnp.float32(1.0), angle)
    s = jnp.where(
        small,
        jnp.float32(0.5) - sq * jnp.float32(1.0 / 48.0),   # 2nd-order Taylor
        jnp.sin(half) / safe,
    )
    comp = jnp.where(is_w, jnp.cos(half), raw * s)
    tensor_b = jnp.where(is_pose, comp, raw)               # (TB, D)

    # Lane-dense product via the (idle) MXU: out[b, m*D+d] = tensor_b[b, d] * aw[m, d].
    out = jnp.dot(
        tensor_b,
        g_ref[...],
        preferred_element_type=jnp.float32,
        precision=jax.lax.Precision.HIGHEST,
    )
    out_ref[...] = out.astype(out_ref.dtype)


# ----------------------------------------------------------------------------
# Wrapper
# ----------------------------------------------------------------------------
def betas_muscle_forward(pose, betas, A, W, num_parts, shape_betas_for_muscles,
                         batch_tile=2048, out_dtype=jnp.float32):
    """Reproduces BetasMusclePredictor.forward; returns (betas_muscle, A*W)."""
    B = pose.shape[0]
    P = num_parts
    S = shape_betas_for_muscles
    M, D = A.shape
    num_pose = 4 * P
    assert D == num_pose + S

    # --- layout plumbing on tiny (B, ~D) arrays (not compute hoisting): puts the
    #     per-part scalars directly on the interleaved quaternion lanes so the
    #     kernel never needs a cross-lane shuffle.
    aa = pose[:, 3:3 + 3 * P].reshape(B, P, 3).astype(jnp.float32)
    sq = jnp.sum(aa * aa, axis=-1)                               # (B, P)
    sq_lanes = jnp.repeat(sq, 4, axis=-1)                        # (B, 4P)
    raw_pose = jnp.concatenate(
        [jnp.ones((B, P, 1), jnp.float32), aa], axis=-1).reshape(B, num_pose)
    if S > 0:
        raw = jnp.concatenate([raw_pose, betas[:, :S].astype(jnp.float32)], axis=-1)
        sq_lanes = jnp.concatenate([sq_lanes, jnp.zeros((B, S), jnp.float32)], axis=-1)
    else:
        raw = raw_pose
    # TODO(synk): sq_lanes could be folded into raw's unused w-lanes (one fewer input
    # DMA, ~6% of traffic) at the cost of an in-kernel 4-lane-group broadcast; low
    # priority relative to the output path.

    # A*W hoisted out of the kernel (tiny parameter-only product): the kernel then has
    # a single batch-tiled output, so the batch grid axis can be "parallel" (v7x
    # megacore sharding).  Scatter A*W onto per-muscle diagonal blocks so that
    #   (tensor_b @ G)[b, m*D + d] = tensor_b[b, d] * aw[m, d].
    aw = (A * W).astype(jnp.float32)                             # (M, D)
    G = (aw[None, :, :] * jnp.eye(D, dtype=jnp.float32)[:, None, :]).reshape(D, M * D)

    MD = M * D
    # Batch tile: whole batch in one grid step when small; otherwise 2048 rows/step.
    # At TB=2048: 2*TB*MD*4 B (double-buffered output) + inputs ~= 11 MB of VMEM.
    TB = B if B <= batch_tile else batch_tile
    grid = (pl.cdiv(B, TB),)

    kernel = functools.partial(_fused_kernel, num_pose=num_pose)
    out_flat = pl.pallas_call(
        kernel,
        out_shape=jax.ShapeDtypeStruct((B, MD), out_dtype),
        grid=grid,
        in_specs=[
            pl.BlockSpec((TB, D), lambda b: (b, 0)),
            pl.BlockSpec((TB, D), lambda b: (b, 0)),
            pl.BlockSpec((D, MD), lambda b: (0, 0)),   # constant -> resident in VMEM
        ],
        out_specs=pl.BlockSpec((TB, MD), lambda b: (b, 0)),
        compiler_params=pltpu.CompilerParams(
            dimension_semantics=("parallel",),          # batch axis splits across TCs
            vmem_limit_bytes=48 * 1024 * 1024,          # above v5e's 16 MiB default
        ),
    )(raw, sq_lanes, G)

    # Contiguous reshape back to (B, M, D): free in XLA.
    betas_muscle = out_flat.reshape(B, M, D)
    # TODO(synk): if downstream tolerates it, pass out_dtype=jnp.bfloat16 to halve the
    # HBM writeback that bounds this kernel (requires loosening test tolerances).
    return betas_muscle, aw


# ----------------------------------------------------------------------------
# Deterministic parameter construction (mirrors __init__)
# ----------------------------------------------------------------------------
def init_params(key, num_parts, num_muscle, shape_betas_for_muscles):
    num_pose = 4 * num_parts
    D = num_pose + shape_betas_for_muscles
    k1, k2 = jax.random.split(key)
    # synthetic muscle_associations (num_parts, num_muscle), deterministic
    muscle_assoc = (jax.random.uniform(k1, (num_parts, num_muscle)) > 0.5).astype(jnp.float32)
    # muscledef.weight ~ Normal(0, 0.001), shape (num_muscle, D)
    W = 0.001 * jax.random.normal(k2, (num_muscle, D), dtype=jnp.float32)
    # A: each part's association copied into its 4 quaternion columns; beta cols = 1
    A_pose = jnp.repeat(muscle_assoc.T, 4, axis=1)  # (num_muscle, num_pose)
    if shape_betas_for_muscles > 0:
        A = jnp.concatenate(
            [A_pose, jnp.ones((num_muscle, shape_betas_for_muscles), jnp.float32)], axis=1
        )
    else:
        A = A_pose
    return A, W, muscle_assoc


# ----------------------------------------------------------------------------
# Pure-JAX reference for verification
# ----------------------------------------------------------------------------
def ref_forward(pose, betas, A, W, num_parts, S):
    B = pose.shape[0]
    aa = pose[:, 3:].reshape(B, num_parts, 3).astype(jnp.float32)
    ang = jnp.sqrt(jnp.sum(aa * aa, axis=-1, keepdims=True))
    half = 0.5 * ang
    small = ang < 1e-6
    s = jnp.where(small, 0.5 - ang * ang / 48.0, jnp.sin(half) / jnp.where(small, 1.0, ang))
    quat = jnp.concatenate([jnp.cos(half), aa * s], axis=-1).reshape(B, num_parts * 4)
    tb = jnp.concatenate([quat, betas[:, :S].astype(jnp.float32)], axis=1) if S > 0 else quat
    aw = A * W
    return aw[None, :, :] * tb[:, None, :], aw


if __name__ == "__main__":
    num_parts = 4                 # -> num_pose = 16
    num_muscle = 16
    shape_betas_for_muscles = 8   # -> D = 24, M*D = 384 = 3*128
    B = 2

    key = jax.random.PRNGKey(0)
    kp, kb, kw = jax.random.split(key, 3)
    pose = 0.3 * jax.random.normal(kp, (B, 3 + 3 * num_parts), dtype=jnp.float32)
    betas = jax.random.normal(kb, (B, 10), dtype=jnp.float32)
    A, W, _ = init_params(kw, num_parts, num_muscle, shape_betas_for_muscles)

    betas_muscle, aw = betas_muscle_forward(
        pose, betas, A, W, num_parts, shape_betas_for_muscles
    )
    jax.block_until_ready((betas_muscle, aw))

    bm_ref, aw_ref = ref_forward(pose, betas, A, W, num_parts, shape_betas_for_muscles)
    assert betas_muscle.shape == (B, num_muscle, 4 * num_parts + shape_betas_for_muscles)
    assert aw.shape == (num_muscle, 4 * num_parts + shape_betas_for_muscles)
    assert jnp.allclose(betas_muscle, bm_ref, atol=1e-5, rtol=1e-5)
    assert jnp.allclose(aw, aw_ref, atol=1e-6, rtol=1e-6)

    print("KERNEL_OK")
</pallas_src>

<mosaic_0001>
module attributes {stable_mosaic.version = 11 : i64} {
  func.func @_fused_kernel(%arg0: i32, %arg1: memref<2x24xf32, #tpu.memory_space<vmem>>, %arg2: memref<2x24xf32, #tpu.memory_space<vmem>>, %arg3: memref<24x384xf32, #tpu.memory_space<vmem>>, %arg4: memref<2x384xf32, #tpu.memory_space<vmem>>) attributes {dimension_semantics = [#tpu.dimension_semantics<parallel>], iteration_bounds = array<i64: 1>, scalar_prefetch = 0 : i64, scratch_operands = 0 : i64, tpu.core_type = #tpu.core_type<tc>, window_params = [{transform_indices = @transform_0, window_bounds = array<i64: 2, 24>}, {transform_indices = @transform_1, window_bounds = array<i64: 2, 24>}, {pipeline_mode = #tpu.pipeline_mode<synchronous>, transform_indices = @transform_2, window_bounds = array<i64: 24, 384>}, {transform_indices = @transform_3, window_bounds = array<i64: 2, 384>}]} {
    %c0 = arith.constant 0 : index
    %c0_0 = arith.constant 0 : index
    %0 = vector.load %arg1[%c0, %c0_0] : memref<2x24xf32, #tpu.memory_space<vmem>>, vector<2x24xf32>
    %c0_1 = arith.constant 0 : index
    %c0_2 = arith.constant 0 : index
    %1 = vector.load %arg2[%c0_1, %c0_2] : memref<2x24xf32, #tpu.memory_space<vmem>>, vector<2x24xf32>
    %2 = tpu.iota {dimensions = array<i32: 1>} : vector<2x24xi32>
    %c16_i32 = arith.constant 16 : i32
    %3 = vector.broadcast %c16_i32 : i32 to vector<2x24xi32>
    %4 = arith.cmpi slt, %2, %3 : vector<2x24xi32>
    %c3_i32 = arith.constant 3 : i32
    %5 = vector.broadcast %c3_i32 : i32 to vector<2x24xi32>
    %6 = arith.andi %2, %5 : vector<2x24xi32>
    %c0_i32 = arith.constant 0 : i32
    %7 = vector.broadcast %c0_i32 : i32 to vector<2x24xi32>
    %8 = arith.cmpi eq, %6, %7 : vector<2x24xi32>
    %9 = arith.andi %4, %8 : vector<2x24xi1>
    %10 = math.sqrt %1 : vector<2x24xf32>
    %cst = arith.constant 5.000000e-01 : f32
    %11 = vector.broadcast %cst : f32 to vector<2x24xf32>
    %12 = arith.mulf %11, %10 : vector<2x24xf32>
    %cst_3 = arith.constant 9.99999997E-7 : f32
    %13 = vector.broadcast %cst_3 : f32 to vector<2x24xf32>
    %14 = arith.cmpf olt, %10, %13 : vector<2x24xf32>
    %cst_4 = arith.constant 1.000000e+00 : f32
    %15 = vector.broadcast %cst_4 : f32 to vector<2x24xf32>
    %16 = arith.select %14, %15, %10 : vector<2x24xi1>, vector<2x24xf32>
    %cst_5 = arith.constant 0.020833334 : f32
    %17 = vector.broadcast %cst_5 : f32 to vector<2x24xf32>
    %18 = arith.mulf %1, %17 : vector<2x24xf32>
    %cst_6 = arith.constant 5.000000e-01 : f32
    %19 = vector.broadcast %cst_6 : f32 to vector<2x24xf32>
    %20 = arith.subf %19, %18 : vector<2x24xf32>
    %21 = math.sin %12 : vector<2x24xf32>
    %22 = arith.divf %21, %16 : vector<2x24xf32>
    %23 = arith.select %14, %20, %22 : vector<2x24xi1>, vector<2x24xf32>
    %24 = math.cos %12 : vector<2x24xf32>
    %25 = arith.mulf %0, %23 : vector<2x24xf32>
    %26 = arith.select %9, %24, %25 : vector<2x24xi1>, vector<2x24xf32>
    %27 = arith.select %4, %26, %0 : vector<2x24xi1>, vector<2x24xf32>
    %c0_7 = arith.constant 0 : index
    %c0_8 = arith.constant 0 : index
    %28 = vector.load %arg3[%c0_7, %c0_8] : memref<24x384xf32, #tpu.memory_space<vmem>>, vector<24x384xf32>
    %cst_9 = arith.constant dense<0.000000e+00> : vector<2x384xf32>
    %29 = tpu.matmul %27, %28, %cst_9 {dimension_numbers = #tpu.dot_dimension_numbers<[1], [0], [0], [1], [0, 0, 1, 1], [], []>, precision = #tpu.contract_precision<fp32>} : vector<2x24xf32>, vector<24x384xf32>, vector<2x384xf32> -> vector<2x384xf32>
    %c0_10 = arith.constant 0 : index
    %c0_11 = arith.constant 0 : index
    %30 = vector.load %arg4[%c0_10, %c0_11] : memref<2x384xf32, #tpu.memory_space<vmem>>, vector<2x384xf32>
    tpu.vector_store %arg4[%c0_10, %c0_11], %29 {strides = array<i32>} : memref<2x384xf32, #tpu.memory_space<vmem>>, vector<2x384xf32>,
    return
  }
  func.func @transform_0(%arg0: i32) -> (i32, i32) {
    %c0_i32 = arith.constant 0 : i32
    %c0_i32_0 = arith.constant 0 : i32
    return %arg0, %c0_i32 : i32, i32
  }
  func.func @transform_1(%arg0: i32) -> (i32, i32) {
    %c0_i32 = arith.constant 0 : i32
    %c0_i32_0 = arith.constant 0 : i32
    return %arg0, %c0_i32 : i32, i32
  }
  func.func @transform_2(%arg0: i32) -> (i32, i32) {
    %c0_i32 = arith.constant 0 : i32
    %c0_i32_0 = arith.constant 0 : i32
    %c0_i32_1 = arith.constant 0 : i32
    return %c0_i32, %c0_i32_0 : i32, i32
  }
  func.func @transform_3(%arg0: i32) -> (i32, i32) {
    %c0_i32 = arith.constant 0 : i32
    %c0_i32_0 = arith.constant 0 : i32
    return %arg0, %c0_i32 : i32, i32
  }
}

</mosaic_0001>

<llo_original>
// kernel: tpu_custom_call.1
$region0: #{tpu_custom_call.1}
  #allocation0 [shape = 'u32[]', space=smem, size = 0x4, offset = 0x4, fixed_abs, tag = 'smem constant byte address 0x4 - core index']
  #allocation1 [shape = 'u32[144,128]{1,0:T(1,128)}', space=vmem, size = 0x12000, scoped, tag = 'internal scratch']
  %s0 = inlined_call_operand.hbm [shape: f32[2,24], index: 0, kind: input, shape index: {}]
  %s1 = inlined_call_operand.vmem [shape: f32[2,24], index: 1, kind: input, shape index: {}]
  %s2 = inlined_call_operand.hbm [shape: f32[24,384], index: 2, kind: input, shape index: {}]
  %s3 = inlined_call_operand.hbm [shape: f32[2,384], index: 3, kind: output, shape index: {}]
  %s4 = sld [smem:[#allocation0]]
  $region30: #{tpu_custom_call.1} parent=0
    _
  %s6 = ssub.s32 1, %s4
  %s7 = scalar_select 0, %s6, %s4
  $region1: #{tpu_custom_call.1} parent=0
    #allocation2 [shape = 'u8[1024]{0}', space=vmem, size = 0x400, scoped, tag = 'input window, operand 0, single buffered']
    #allocation3 [shape = 's32[1]{0}', space=sflag, size = 0x4, scoped, tag = 'scoped memory for tpu_custom_call.1']
    #allocation4 [shape = 's32[1]{0}', space=sflag, size = 0x4, scoped, tag = 'scoped memory for tpu_custom_call.1']
    #allocation5 [shape = 'u8[36864]{0}', space=vmem, size = 0x9000, scoped, tag = 'input window, operand 2, single buffered']
    #allocation6 [shape = 's32[1]{0}', space=sflag, size = 0x4, scoped, tag = 'scoped memory for tpu_custom_call.1']
    #allocation7 [shape = 'u8[3072]{0}', space=vmem, size = 0xc00, scoped, tag = 'output window, operand 0, single buffered']
    %8 = vsyncpa [#allocation3], 0
    %9 = vsyncpa [#allocation6], 0
    %10 = vsyncpa [#allocation4], 0
    // Predicated region
    $region2: #{tpu_custom_call.1} parent=1 // pred_check
      _
    $region3: #{tpu_custom_call.1} parent=1 // pred_check_branch
      %12 = sbr.rel (0) target = $region5
    $region4: #{tpu_custom_call.1} parent=1 // pred_region
      %s14 = ssub.s32 32, 32
      %15 = vsyncadd [#allocation3], %s14
      %s17 = sshll.u32 [#allocation2], 4
      %s18 = int_to_ptr.vmem [resolvable:$true] %s17
      %20 = dma.hbm_to_vmem [thread:$0]  %s0, 32, %s18, [#allocation3]
    $region5: #{tpu_custom_call.1} parent=1 // pred_fallthru
      _
    // Predicated region
    $region6: #{tpu_custom_call.1} parent=1 // pred_check
      _
    $region7: #{tpu_custom_call.1} parent=1 // pred_check_branch
      %22 = sbr.rel (0) target = $region9
    $region8: #{tpu_custom_call.1} parent=1 // pred_region
      _
    $region9: #{tpu_custom_call.1} parent=1 // pred_fallthru
      _
    // Predicated region
    $region10: #{tpu_custom_call.1} parent=1 // pred_check
      _
    $region11: #{tpu_custom_call.1} parent=1 // pred_check_branch
      %24 = sbr.rel (0) target = $region13
    $region12: #{tpu_custom_call.1} parent=1 // pred_region
      %s26 = ssub.s32 1152, 1152
      %27 = vsyncadd [#allocation6], %s26
      %s28 = sshll.u32 [#allocation5], 4
      %s29 = int_to_ptr.vmem [resolvable:$true] %s28
      %34 = dma.hbm_to_vmem [thread:$0]  %s2, 1152, %s29, [#allocation6], 384, 384, 24
    $region13: #{tpu_custom_call.1} parent=1 // pred_fallthru
      _
    // Predicated region
    $region14: #{tpu_custom_call.1} parent=1 // pred_check
      _
    $region15: #{tpu_custom_call.1} parent=1 // pred_check_branch
      %36 = sbr.rel (0) target = $region17
    $region16: #{tpu_custom_call.1} parent=1 // pred_region
      %37 = dma.done [#allocation3], 32
    $region17: #{tpu_custom_call.1} parent=1 // pred_fallthru
      _
    // Predicated region
    $region18: #{tpu_custom_call.1} parent=1 // pred_check
      _
    $region19: #{tpu_custom_call.1} parent=1 // pred_check_branch
      %39 = sbr.rel (0) target = $region21
    $region20: #{tpu_custom_call.1} parent=1 // pred_region
      %40 = dma.done [#allocation6], 1152
    $region21: #{tpu_custom_call.1} parent=1 // pred_fallthru
      _
    %v41 = vld [vmem:[#allocation2] sm:$0x3]
    %v42 = vld [vmem:[%s1] sm:$0x3]
    %v43 = vlaneseq
    %v44 = vand.u32 %v43, 127
    %vm45 = vcmp.lt.s32.totalorder %v44, 16
    %v46 = vand.u32 %v44, 3
    %vm47 = vcmp.eq.s32.totalorder %v46, 0
    %vm48 = vmand %vm45, %vm47
    %v49 = vrsqrt.pop %v42
    %v50 = vmul.f32 %v42, %v49
    %vm51 = vcmp.eq.f32.partialorder %v42, inf
    %v52 = vsel %vm51, %v42, %v50
    %vm53 = vcmp.eq.f32.partialorder %v42, 0.0
    %v54 = vand.u32 %v42, 2147483648
    %v55 = vsel %vm53, %v54, %v52
    %v56 = vmul.f32 %v55, 0.5
    %vm57 = vcmp.lt.f32.partialorder %v55, 1e-06
    %v58 = vsel %vm57, 1.0, %v55
    %v59 = vmul.f32 %v42, 0.020833334
    %v60 = vsub.f32 0.5, %v59
    %v61 = vand.u32 2147483647, %v56
    %vm62 = vcmp.le.f32.partialorder %v61, 0.7853982
    %vm63 = vcmp.lt.s32.totalorder %v56, 0
    %v64 = vand.u32 %v56, 2139095040
    %v65 = vshrl.u32 %v64, 23
    %v66 = vsub.s32 %v65, 127
    %v67 = vand.u32 2147483647, %v56
    %v68 = vand.u32 %v67, 8388607
    %v69 = vor.u32 %v68, 8388608
    %v70 = vsub.s32 0, %v69
    %v71 = vadd.s32 %v66, 1
    %vm72 = vcmp.gt.s32.totalorder %v71, 0
    %v73 = vsel %vm72, %v71, 0
    %v74 = vshrl.u32 %v73, 5
    %v75 = vand.u32 %v73, 31
    %v76 = vsub.s32 32, %v75
    %v77 = vshrl.u32 683565275, %v76
    %v78 = vshll.u32 683565275, %v75
    %v79 = vshrl.u32 2475754826, %v76
    %v80 = vor.u32 %v78, %v79
    %v81 = vshll.u32 2475754826, %v75
    %v82 = vshrl.u32 2131351028, %v76
    %v83 = vor.u32 %v81, %v82
    %v84 = vshll.u32 2131351028, %v75
    %v85 = vshrl.u32 2102212464, %v76
    %v86 = vor.u32 %v84, %v85
    %v87 = vshll.u32 2102212464, %v75
    %v88 = vshrl.u32 920167782, %v76
    %v89 = vor.u32 %v87, %v88
    %v90 = vshll.u32 920167782, %v75
    %v91 = vshrl.u32 1326507024, %v76
    %v92 = vor.u32 %v90, %v91
    %vm93 = vcmp.lt.s32.totalorder %v74, 1
    %vm94 = vcmp.lt.s32.totalorder %v74, 2
    %vm95 = vcmp.lt.s32.totalorder %v74, 3
    %vm96 = vcmp.lt.s32.totalorder %v74, 4
    %v97 = vsel %vm93, %v77, %v80
    %v98 = vsel %vm96, %v86, 2102212464
    %v99 = vsel %vm95, %v83, %v98
    %v100 = vsel %vm94, %v97, %v99
    %v101 = vsel %vm93, %v80, %v83
    %v102 = vsel %vm96, %v89, 920167782
    %v103 = vsel %vm95, %v86, %v102
    %v104 = vsel %vm94, %v101, %v103
    %v105 = vsel %vm93, %v83, %v86
    %v106 = vsel %vm96, %v92, 1326507024
    %v107 = vsel %vm95, %v89, %v106
    %v108 = vsel %vm94, %v105, %v107
    %v109 = vshll.u32 %v69, 8
    %v110 = vmul.u32.u64.compose %v109, %v108
    %v111 = vextract.low.u32 %v110
    %v112 = vextract.high.u32 %v110
    %v113 = vmul.u32.u64.compose %v109, %v104
    %v114 = vextract.low.u32 %v113
    %v115 = vextract.high.u32 %v113
    %v116 = vmul.u32 %v109, %v100
    %v117 = vadd.s32 %v112, %v114
    %vm118 = vc.u32 %v112, %v114
    %v119 = vadd.s32 %v115, 1
    %v120 = vsel %vm118, %v119, %v115
    %v121 = vadd.s32 %v116, %v120
    %v122 = vadd.s32 %v121, 536870912
    %v123 = vshrl.u32 %v122, 30
    %v124 = vshll.u32 %v123, 30
    %v125 = vsub.s32 %v121, %v124
    %vm126 = vcmp.lt.s32.totalorder %v125, 0
    %v127 = vsub.s32 0, %v125
    %v128 = vsel %vm126, %v127, %v125
    %v129 = vclz %v128
    %v130 = vsub.s32 %v129, 2
    %vm131 = vcmp.gt.s32.totalorder 0, %v130
    %v132 = vsel %vm131, 0, %v130
    %v133 = vsub.s32 32, %v132
    %v134 = vshll.u32 %v125, %v132
    %v135 = vshrl.u32 %v117, %v133
    %v136 = vor.u32 %v134, %v135
    %v137 = vsub.s32 4294967266, %v132
    %v138 = vadd.s32 %v137, 127
    %v139 = vshll.u32 %v138, 23
    %v140 = vor.u32 4788187, %v139
    %v141 = vand.u32 2147483647, %v140
    %v143 = vcvt.s32.f32 %v136
    %v144 = vmul.f32 %v143, %v141
    %v145 = vxor.u32 %v144, 2147483648
    %v146 = vsel %vm63, %v145, %v144
    %v147 = vsub.s32 4, %v123
    %v148 = vsel %vm63, %v147, %v123
    %v149 = vsel %vm62, %v56, %v146
    %v150 = vsel %vm62, 0, %v148
    %v151 = vcosq.f32.pop %v149
    %v152 = vsinq.f32.pop %v149
    %vm153 = vweird.f32 %v56
    %v154 = vadd.s32 %v150, 3
    %v155 = vand.u32 %v154, 3
    %vm156 = vcmp.lt.s32.totalorder %v155, 2
    %vm157 = vcmp.eq.s32.totalorder %v155, 0
    %v158 = vxor.u32 %v152, 2147483648
    %v159 = vsel %vm157, %v151, %v158
    %vm160 = vcmp.eq.s32.totalorder %v155, 2
    %v161 = vxor.u32 %v151, 2147483648
    %v162 = vsel %vm160, %v161, %v152
    %v163 = vsel %vm156, %v159, %v162
    %v164 = vsel %vm153, nan, %v163
    %v165 = vrcp.pop %v58
    %v166 = vmul.f32 %v164, %v165
    %v167 = vsel %vm57, %v60, %v166
    %v168 = vand.u32 2147483647, %v56
    %vm169 = vcmp.le.f32.partialorder %v168, 0.7853982
    %vm170 = vcmp.lt.s32.totalorder %v56, 0
    %v171 = vand.u32 %v56, 2139095040
    %v172 = vshrl.u32 %v171, 23
    %v173 = vsub.s32 %v172, 127
    %v174 = vand.u32 2147483647, %v56
    %v175 = vand.u32 %v174, 8388607
    %v176 = vor.u32 %v175, 8388608
    %v177 = vsub.s32 0, %v176
    %v178 = vadd.s32 %v173, 1
    %vm179 = vcmp.gt.s32.totalorder %v178, 0
    %v180 = vsel %vm179, %v178, 0
    %v181 = vshrl.u32 %v180, 5
    %v182 = vand.u32 %v180, 31
    %v183 = vsub.s32 32, %v182
    %v184 = vshrl.u32 683565275, %v183
    %v185 = vshll.u32 683565275, %v182
    %v186 = vshrl.u32 2475754826, %v183
    %v187 = vor.u32 %v185, %v186
    %v188 = vshll.u32 2475754826, %v182
    %v189 = vshrl.u32 2131351028, %v183
    %v190 = vor.u32 %v188, %v189
    %v191 = vshll.u32 2131351028, %v182
    %v192 = vshrl.u32 2102212464, %v183
    %v193 = vor.u32 %v191, %v192
    %v194 = vshll.u32 2102212464, %v182
    %v195 = vshrl.u32 920167782, %v183
    %v196 = vor.u32 %v194, %v195
    %v197 = vshll.u32 920167782, %v182
    %v198 = vshrl.u32 1326507024, %v183
    %v199 = vor.u32 %v197, %v198
    %vm200 = vcmp.lt.s32.totalorder %v181, 1
    %vm201 = vcmp.lt.s32.totalorder %v181, 2
    %vm202 = vcmp.lt.s32.totalorder %v181, 3
    %vm203 = vcmp.lt.s32.totalorder %v181, 4
    %v204 = vsel %vm200, %v184, %v187
    %v205 = vsel %vm203, %v193, 2102212464
    %v206 = vsel %vm202, %v190, %v205
    %v207 = vsel %vm201, %v204, %v206
    %v208 = vsel %vm200, %v187, %v190
    %v209 = vsel %vm203, %v196, 920167782
    %v210 = vsel %vm202, %v193, %v209
    %v211 = vsel %vm201, %v208, %v210
    %v212 = vsel %vm200, %v190, %v193
    %v213 = vsel %vm203, %v199, 1326507024
    %v214 = vsel %vm202, %v196, %v213
    %v215 = vsel %vm201, %v212, %v214
    %v216 = vshll.u32 %v176, 8
    %v217 = vmul.u32.u64.compose %v216, %v215
    %v218 = vextract.low.u32 %v217
    %v219 = vextract.high.u32 %v217
    %v220 = vmul.u32.u64.compose %v216, %v211
    %v221 = vextract.low.u32 %v220
    %v222 = vextract.high.u32 %v220
    %v223 = vmul.u32 %v216, %v207
    %v224 = vadd.s32 %v219, %v221
    %vm225 = vc.u32 %v219, %v221
    %v226 = vadd.s32 %v222, 1
    %v227 = vsel %vm225, %v226, %v222
    %v228 = vadd.s32 %v223, %v227
    %v229 = vadd.s32 %v228, 536870912
    %v230 = vshrl.u32 %v229, 30
    %v231 = vshll.u32 %v230, 30
    %v232 = vsub.s32 %v228, %v231
    %vm233 = vcmp.lt.s32.totalorder %v232, 0
    %v234 = vsub.s32 0, %v232
    %v235 = vsel %vm233, %v234, %v232
    %v236 = vclz %v235
    %v237 = vsub.s32 %v236, 2
    %vm238 = vcmp.gt.s32.totalorder 0, %v237
    %v239 = vsel %vm238, 0, %v237
    %v240 = vsub.s32 32, %v239
    %v241 = vshll.u32 %v232, %v239
    %v242 = vshrl.u32 %v224, %v240
    %v243 = vor.u32 %v241, %v242
    %v244 = vsub.s32 4294967266, %v239
    %v245 = vadd.s32 %v244, 127
    %v246 = vshll.u32 %v245, 23
    %v247 = vor.u32 4788187, %v246
    %v248 = vand.u32 2147483647, %v247
    %v250 = vcvt.s32.f32 %v243
    %v251 = vmul.f32 %v250, %v248
    %v252 = vxor.u32 %v251, 2147483648
    %v253 = vsel %vm170, %v252, %v251
    %v254 = vsub.s32 4, %v230
    %v255 = vsel %vm170, %v254, %v230
    %v256 = vsel %vm169, %v56, %v253
    %v257 = vsel %vm169, 0, %v255
    %v258 = vcosq.f32.pop %v256
    %v259 = vsinq.f32.pop %v256
    %vm260 = vweird.f32 %v56
    %v261 = vand.u32 %v257, 3
    %vm262 = vcmp.lt.s32.totalorder %v261, 2
    %vm263 = vcmp.eq.s32.totalorder %v261, 0
    %v264 = vxor.u32 %v259, 2147483648
    %v265 = vsel %vm263, %v258, %v264
    %vm266 = vcmp.eq.s32.totalorder %v261, 2
    %v267 = vxor.u32 %v258, 2147483648
    %v268 = vsel %vm266, %v267, %v259
    %v269 = vsel %vm262, %v265, %v268
    %v270 = vsel %vm260, nan, %v269
    %v271 = vmul.f32 %v41, %v167
    %v272 = vsel %vm48, %v270, %v271
    %v273 = vsel %vm45, %v272, %v41
    %v274 = vld [vmem:[#allocation5] sm:$0xff]
    %v275 = vld [vmem:[#allocation5 + $0x8] sm:$0xff]
    %v276 = vld [vmem:[#allocation5 + $0x10] sm:$0xff]
    %v277 = vld [vmem:[#allocation5 + $0x18] sm:$0xff]
    %v278 = vld [vmem:[#allocation5 + $0x20] sm:$0xff]
    %v279 = vld [vmem:[#allocation5 + $0x28] sm:$0xff]
    %v280 = vld [vmem:[#allocation5 + $0x30] sm:$0xff]
    %v281 = vld [vmem:[#allocation5 + $0x38] sm:$0xff]
    %v282 = vld [vmem:[#allocation5 + $0x40] sm:$0xff]
    %vm283 = vcmask 195584
    %v285 = vsel %vm283, %v273, 0
    %v287 = vand.u32 %v275, 4294901760
    %288 = vmatprep.subr.mxu0 %v287
    %v289 = vand.u32 %v274, 4294901760
    %290 = vmatpush1.msra.mxu0 %v289
    %v291 = vand.u32 %v278, 4294901760
    %292 = vmatprep.subr.mxu0 %v291
    %v293 = vand.u32 %v277, 4294901760
    %294 = vmatpush1.msra.mxu0 %v293
    %v295 = vand.u32 %v281, 4294901760
    %296 = vmatprep.subr.mxu0 %v295
    %v297 = vand.u32 %v280, 4294901760
    %298 = vmatpush1.msra.mxu0 %v297
    %299 = vmatprep.subr.mxu0 0.0
    %300 = vmatpush1.msra.mxu0 0.0
    %301 = vmatprep.subr.mxu0 0.0
    %302 = vmatpush1.msra.mxu0 0.0
    %303 = vmatprep.subr.mxu0 0.0
    %304 = vmatpush1.msra.mxu0 0.0
    %305 = vmatprep.subr.mxu0 0.0
    %306 = vmatpush1.msra.mxu0 0.0
    %307 = vmatprep.subr.mxu0 0.0
    %308 = vmatpush1.msra.mxu0 0.0
    %309 = vmatprep.subr.mxu0 0.0
    %310 = vmatpush1.msra.mxu0 0.0
    %311 = vmatprep.subr.mxu0 0.0
    %312 = vmatpush1.msra.mxu0 0.0
    %313 = vmatprep.subr.mxu0 0.0
    %314 = vmatpush1.msra.mxu0 0.0
    %315 = vmatprep.subr.mxu0 0.0
    %316 = vmatpush1.msra.mxu0 0.0
    %317 = vmatprep.subr.mxu0 0.0
    %318 = vmatpush1.msra.mxu0 0.0
    %319 = vmatprep.subr.mxu0 0.0
    %320 = vmatpush1.msra.mxu0 0.0
    %321 = vmatprep.subr.mxu0 0.0
    %322 = vmatpush1.msra.mxu0 0.0
    %323 = vmatprep.subr.mxu0 0.0
    %324 = vmatpush1.msra.mxu0 0.0
    %325 = vmatprep.subr.mxu0 0.0
    %326 = vmatpush1.msra.mxu0 0.0
    %327 = vmatprep.subr.mxu0 0.0
    %328 = vmatpush1.msra.mxu0 0.0
    %329 = vmatprep.subr.mxu0 0.0
    %330 = vmatpush1.msra.mxu0 0.0
    %331 = vmatprep.subr.mxu0 0.0
    %332 = vmatpush1.msra.mxu0 0.0
    %333 = vmatprep.subr.mxu0 0.0
    %334 = vmatpush1.msra.mxu0 0.0
    %335 = vmatprep.subr.mxu0 0.0
    %336 = vmatpush1.msra.mxu0 0.0
    %337 = vmatprep.subr.mxu0 0.0
    %338 = vmatpush1.msra.mxu0 0.0
    %339 = vmatprep.subr.mxu0 0.0
    %340 = vmatpush1.msra.mxu0 0.0
    %341 = vmatprep.subr.mxu0 0.0
    %342 = vmatpush1.msra.mxu0 0.0
    %343 = vmatprep.subr.mxu0 0.0
    %344 = vmatpush1.msra.mxu0 0.0
    %345 = vmatprep.subr.mxu0 0.0
    %346 = vmatpush1.msra.mxu0 0.0
    %347 = vmatprep.subr.mxu0 0.0
    %348 = vmatpush1.msra.mxu0 0.0
    %349 = vmatprep.subr.mxu0 0.0
    %350 = vmatpush1.msra.mxu0 0.0
    %351 = vmatprep.subr.mxu0 0.0
    %352 = vmatpush1.msra.mxu0 0.0
    %353 = vmatprep.subr.mxu0 0.0
    %354 = vmatpush1.msra.mxu0 0.0
    %355 = vmatprep.subr.mxu0 0.0
    %356 = vmatpush1.msra.mxu0 0.0
    %357 = vmatprep.mubr.f32.mxu0 0.0
    %v358 = vand.u32 %v285, 4294901760
    %v359 = vsub.f32 %v285, %v358
    %v360 = vand.u32 %v359, 4294901760
    %v361 = vsub.f32 %v359, %v360
    %v362 = vand.u32 %v361, 4294901760
    %363 = vmatmul.mubr.f32.gmra.mrb[0].mxu0 %v362
    %v364 = vpop.f32.mrb[0].mxu0
    %v365 = vadd.f32 0.0, %v364
    %v366 = vpop.f32.mrb[0].mxu0
    %v367 = vadd.f32 0.0, %v366
    %368 = vdwg.mxu0
    %v369 = vand.u32 %v275, 4294901760
    %v370 = vsub.f32 %v275, %v369
    %v371 = vand.u32 %v370, 4294901760
    %v372 = vsub.f32 %v370, %v371
    %v373 = vand.u32 %v372, 4294901760
    %374 = vmatprep.subr.mxu0 %v373
    %v375 = vand.u32 %v274, 4294901760
    %v376 = vsub.f32 %v274, %v375
    %v377 = vand.u32 %v376, 4294901760
    %v378 = vsub.f32 %v376, %v377
    %v379 = vand.u32 %v378, 4294901760
    %380 = vmatpush1.msra.mxu0 %v379
    %v381 = vand.u32 %v278, 4294901760
    %v382 = vsub.f32 %v278, %v381
    %v383 = vand.u32 %v382, 4294901760
    %v384 = vsub.f32 %v382, %v383
    %v385 = vand.u32 %v384, 4294901760
    %386 = vmatprep.subr.mxu0 %v385
    %v387 = vand.u32 %v277, 4294901760
    %v388 = vsub.f32 %v277, %v387
    %v389 = vand.u32 %v388, 4294901760
    %v390 = vsub.f32 %v388, %v389
    %v391 = vand.u32 %v390, 4294901760
    %392 = vmatpush1.msra.mxu0 %v391
    %v393 = vand.u32 %v281, 4294901760
    %v394 = vsub.f32 %v281, %v393
    %v395 = vand.u32 %v394, 4294901760
    %v396 = vsub.f32 %v394, %v395
    %v397 = vand.u32 %v396, 4294901760
    %398 = vmatprep.subr.mxu0 %v397
    %v399 = vand.u32 %v280, 4294901760
    %v400 = vsub.f32 %v280, %v399
    %v401 = vand.u32 %v400, 4294901760
    %v402 = vsub.f32 %v400, %v401
    %v403 = vand.u32 %v402, 4294901760
    %404 = vmatpush1.msra.mxu0 %v403
    %405 = vmatprep.subr.mxu0 0.0
    %406 = vmatpush1.msra.mxu0 0.0
    %407 = vmatprep.subr.mxu0 0.0
    %408 = vmatpush1.msra.mxu0 0.0
    %409 = vmatprep.subr.mxu0 0.0
    %410 = vmatpush1.msra.mxu0 0.0
    %411 = vmatprep.subr.mxu0 0.0
    %412 = vmatpush1.msra.mxu0 0.0
    %413 = vmatprep.subr.mxu0 0.0
    %414 = vmatpush1.msra.mxu0 0.0
    %415 = vmatprep.subr.mxu0 0.0
    %416 = vmatpush1.msra.mxu0 0.0
    %417 = vmatprep.subr.mxu0 0.0
    %418 = vmatpush1.msra.mxu0 0.0
    %419 = vmatprep.subr.mxu0 0.0
    %420 = vmatpush1.msra.mxu0 0.0
    %421 = vmatprep.subr.mxu0 0.0
    %422 = vmatpush1.msra.mxu0 0.0
    %423 = vmatprep.subr.mxu0 0.0
    %424 = vmatpush1.msra.mxu0 0.0
    %425 = vmatprep.subr.mxu0 0.0
    %426 = vmatpush1.msra.mxu0 0.0
    %427 = vmatprep.subr.mxu0 0.0
    %428 = vmatpush1.msra.mxu0 0.0
    %429 = vmatprep.subr.mxu0 0.0
    %430 = vmatpush1.msra.mxu0 0.0
    %431 = vmatprep.subr.mxu0 0.0
    %432 = vmatpush1.msra.mxu0 0.0
    %433 = vmatprep.subr.mxu0 0.0
    %434 = vmatpush1.msra.mxu0 0.0
    %435 = vmatprep.subr.mxu0 0.0
    %436 = vmatpush1.msra.mxu0 0.0
    %437 = vmatprep.subr.mxu0 0.0
    %438 = vmatpush1.msra.mxu0 0.0
    %439 = vmatprep.subr.mxu0 0.0
    %440 = vmatpush1.msra.mxu0 0.0
    %441 = vmatprep.subr.mxu0 0.0
    %442 = vmatpush1.msra.mxu0 0.0
    %443 = vmatprep.subr.mxu0 0.0
    %444 = vmatpush1.msra.mxu0 0.0
    %445 = vmatprep.subr.mxu0 0.0
    %446 = vmatpush1.msra.mxu0 0.0
    %447 = vmatprep.subr.mxu0 0.0
    %448 = vmatpush1.msra.mxu0 0.0
    %449 = vmatprep.subr.mxu0 0.0
    %450 = vmatpush1.msra.mxu0 0.0
    %451 = vmatprep.subr.mxu0 0.0
    %452 = vmatpush1.msra.mxu0 0.0
    %453 = vmatprep.subr.mxu0 0.0
    %454 = vmatpush1.msra.mxu0 0.0
    %455 = vmatprep.subr.mxu0 0.0
    %456 = vmatpush1.msra.mxu0 0.0
    %457 = vmatprep.subr.mxu0 0.0
    %458 = vmatpush1.msra.mxu0 0.0
    %459 = vmatprep.subr.mxu0 0.0
    %460 = vmatpush1.msra.mxu0 0.0
    %461 = vmatprep.subr.mxu0 0.0
    %462 = vmatpush1.msra.mxu0 0.0
    %463 = vmatprep.mubr.f32.mxu0 0.0
    %v464 = vand.u32 %v285, 4294901760
    %465 = vmatmul.mubr.f32.gmra.mrb[0].mxu0 %v464
    %v466 = vpop.f32.mrb[0].mxu0
    %v467 = vadd.f32 %v365, %v466
    %v468 = vpop.f32.mrb[0].mxu0
    %v469 = vadd.f32 %v367, %v468
    %470 = vdwg.mxu0
    %v471 = vand.u32 %v275, 4294901760
    %v472 = vsub.f32 %v275, %v471
    %473 = vmatprep.subr.mxu0 %v472
    %v474 = vand.u32 %v274, 4294901760
    %v475 = vsub.f32 %v274, %v474
    %476 = vmatpush1.msra.mxu0 %v475
    %v477 = vand.u32 %v278, 4294901760
    %v478 = vsub.f32 %v278, %v477
    %479 = vmatprep.subr.mxu0 %v478
    %v480 = vand.u32 %v277, 4294901760
    %v481 = vsub.f32 %v277, %v480
    %482 = vmatpush1.msra.mxu0 %v481
    %v483 = vand.u32 %v281, 4294901760
    %v484 = vsub.f32 %v281, %v483
    %485 = vmatprep.subr.mxu0 %v484
    %v486 = vand.u32 %v280, 4294901760
    %v487 = vsub.f32 %v280, %v486
    %488 = vmatpush1.msra.mxu0 %v487
    %489 = vmatprep.subr.mxu0 0.0
    %490 = vmatpush1.msra.mxu0 0.0
    %491 = vmatprep.subr.mxu0 0.0
    %492 = vmatpush1.msra.mxu0 0.0
    %493 = vmatprep.subr.mxu0 0.0
    %494 = vmatpush1.msra.mxu0 0.0
    %495 = vmatprep.subr.mxu0 0.0
    %496 = vmatpush1.msra.mxu0 0.0
    %497 = vmatprep.subr.mxu0 0.0
    %498 = vmatpush1.msra.mxu0 0.0
    %499 = vmatprep.subr.mxu0 0.0
    %500 = vmatpush1.msra.mxu0 0.0
    %501 = vmatprep.subr.mxu0 0.0
    %502 = vmatpush1.msra.mxu0 0.0
    %503 = vmatprep.subr.mxu0 0.0
    %504 = vmatpush1.msra.mxu0 0.0
    %505 = vmatprep.subr.mxu0 0.0
    %506 = vmatpush1.msra.mxu0 0.0
    %507 = vmatprep.subr.mxu0 0.0
    %508 = vmatpush1.msra.mxu0 0.0
    %509 = vmatprep.subr.mxu0 0.0
    %510 = vmatpush1.msra.mxu0 0.0
    %511 = vmatprep.subr.mxu0 0.0
    %512 = vmatpush1.msra.mxu0 0.0
    %513 = vmatprep.subr.mxu0 0.0
    %514 = vmatpush1.msra.mxu0 0.0
    %515 = vmatprep.subr.mxu0 0.0
    %516 = vmatpush1.msra.mxu0 0.0
    %517 = vmatprep.subr.mxu0 0.0
    %518 = vmatpush1.msra.mxu0 0.0
    %519 = vmatprep.subr.mxu0 0.0
    %520 = vmatpush1.msra.mxu0 0.0
    %521 = vmatprep.subr.mxu0 0.0
    %522 = vmatpush1.msra.mxu0 0.0
    %523 = vmatprep.subr.mxu0 0.0
    %524 = vmatpush1.msra.mxu0 0.0
    %525 = vmatprep.subr.mxu0 0.0
    %526 = vmatpush1.msra.mxu0 0.0
    %527 = vmatprep.subr.mxu0 0.0
    %528 = vmatpush1.msra.mxu0 0.0
    %529 = vmatprep.subr.mxu0 0.0
    %530 = vmatpush1.msra.mxu0 0.0
    %531 = vmatprep.subr.mxu0 0.0
    %532 = vmatpush1.msra.mxu0 0.0
    %533 = vmatprep.subr.mxu0 0.0
    %534 = vmatpush1.msra.mxu0 0.0
    %535 = vmatprep.subr.mxu0 0.0
    %536 = vmatpush1.msra.mxu0 0.0
    %537 = vmatprep.subr.mxu0 0.0
    %538 = vmatpush1.msra.mxu0 0.0
    %539 = vmatprep.subr.mxu0 0.0
    %540 = vmatpush1.msra.mxu0 0.0
    %541 = vmatprep.subr.mxu0 0.0
    %542 = vmatpush1.msra.mxu0 0.0
    %543 = vmatprep.subr.mxu0 0.0
    %544 = vmatpush1.msra.mxu0 0.0
    %545 = vmatprep.subr.mxu0 0.0
    %546 = vmatpush1.msra.mxu0 0.0
    %547 = vmatprep.mubr.f32.mxu0 0.0
    %v548 = vand.u32 %v285, 4294901760
    %v549 = vsub.f32 %v285, %v548
    %550 = vmatmul.mubr.f32.gmra.mrb[0].mxu0 %v549
    %v551 = vpop.f32.mrb[0].mxu0
    %v552 = vadd.f32 %v467, %v551
    %v553 = vpop.f32.mrb[0].mxu0
    %v554 = vadd.f32 %v469, %v553
    %555 = vdwg.mxu0
    %v556 = vand.u32 %v275, 4294901760
    %557 = vmatprep.subr.mxu0 %v556
    %v558 = vand.u32 %v274, 4294901760
    %559 = vmatpush1.msra.mxu0 %v558
    %v560 = vand.u32 %v278, 4294901760
    %561 = vmatprep.subr.mxu0 %v560
    %v562 = vand.u32 %v277, 4294901760
    %563 = vmatpush1.msra.mxu0 %v562
    %v564 = vand.u32 %v281, 4294901760
    %565 = vmatprep.subr.mxu0 %v564
    %v566 = vand.u32 %v280, 4294901760
    %567 = vmatpush1.msra.mxu0 %v566
    %568 = vmatprep.subr.mxu0 0.0
    %569 = vmatpush1.msra.mxu0 0.0
    %570 = vmatprep.subr.mxu0 0.0
    %571 = vmatpush1.msra.mxu0 0.0
    %572 = vmatprep.subr.mxu0 0.0
    %573 = vmatpush1.msra.mxu0 0.0
    %574 = vmatprep.subr.mxu0 0.0
    %575 = vmatpush1.msra.mxu0 0.0
    %576 = vmatprep.subr.mxu0 0.0
    %577 = vmatpush1.msra.mxu0 0.0
    %578 = vmatprep.subr.mxu0 0.0
    %579 = vmatpush1.msra.mxu0 0.0
    %580 = vmatprep.subr.mxu0 0.0
    %581 = vmatpush1.msra.mxu0 0.0
    %582 = vmatprep.subr.mxu0 0.0
    %583 = vmatpush1.msra.mxu0 0.0
    %584 = vmatprep.subr.mxu0 0.0
    %585 = vmatpush1.msra.mxu0 0.0
    %586 = vmatprep.subr.mxu0 0.0
    %587 = vmatpush1.msra.mxu0 0.0
    %588 = vmatprep.subr.mxu0 0.0
    %589 = vmatpush1.msra.mxu0 0.0
    %590 = vmatprep.subr.mxu0 0.0
    %591 = vmatpush1.msra.mxu0 0.0
    %592 = vmatprep.subr.mxu0 0.0
    %593 = vmatpush1.msra.mxu0 0.0
    %594 = vmatprep.subr.mxu0 0.0
    %595 = vmatpush1.msra.mxu0 0.0
    %596 = vmatprep.subr.mxu0 0.0
    %597 = vmatpush1.msra.mxu0 0.0
    %598 = vmatprep.subr.mxu0 0.0
    %599 = vmatpush1.msra.mxu0 0.0
    %600 = vmatprep.subr.mxu0 0.0
    %601 = vmatpush1.msra.mxu0 0.0
    %602 = vmatprep.subr.mxu0 0.0
    %603 = vmatpush1.msra.mxu0 0.0
    %604 = vmatprep.subr.mxu0 0.0
    %605 = vmatpush1.msra.mxu0 0.0
    %606 = vmatprep.subr.mxu0 0.0
    %607 = vmatpush1.msra.mxu0 0.0
    %608 = vmatprep.subr.mxu0 0.0
    %609 = vmatpush1.msra.mxu0 0.0
    %610 = vmatprep.subr.mxu0 0.0
    %611 = vmatpush1.msra.mxu0 0.0
    %612 = vmatprep.subr.mxu0 0.0
    %613 = vmatpush1.msra.mxu0 0.0
    %614 = vmatprep.subr.mxu0 0.0
    %615 = vmatpush1.msra.mxu0 0.0
    %616 = vmatprep.subr.mxu0 0.0
    %617 = vmatpush1.msra.mxu0 0.0
    %618 = vmatprep.subr.mxu0 0.0
    %619 = vmatpush1.msra.mxu0 0.0
    %620 = vmatprep.subr.mxu0 0.0
    %621 = vmatpush1.msra.mxu0 0.0
    %622 = vmatprep.subr.mxu0 0.0
    %623 = vmatpush1.msra.mxu0 0.0
    %624 = vmatprep.subr.mxu0 0.0
    %625 = vmatpush1.msra.mxu0 0.0
    %626 = vmatprep.mubr.f32.mxu0 0.0
    %v627 = vand.u32 %v285, 4294901760
    %v628 = vsub.f32 %v285, %v627
    %v629 = vand.u32 %v628, 4294901760
    %630 = vmatmul.mubr.f32.gmra.mrb[0].mxu0 %v629
    %v631 = vpop.f32.mrb[0].mxu0
    %v632 = vadd.f32 %v552, %v631
    %v633 = vpop.f32.mrb[0].mxu0
    %v634 = vadd.f32 %v554, %v633
    %635 = vdwg.mxu0
    %v636 = vand.u32 %v275, 4294901760
    %v637 = vsub.f32 %v275, %v636
    %v638 = vand.u32 %v637, 4294901760
    %639 = vmatprep.subr.mxu0 %v638
    %v640 = vand.u32 %v274, 4294901760
    %v641 = vsub.f32 %v274, %v640
    %v642 = vand.u32 %v641, 4294901760
    %643 = vmatpush1.msra.mxu0 %v642
    %v644 = vand.u32 %v278, 4294901760
    %v645 = vsub.f32 %v278, %v644
    %v646 = vand.u32 %v645, 4294901760
    %647 = vmatprep.subr.mxu0 %v646
    %v648 = vand.u32 %v277, 4294901760
    %v649 = vsub.f32 %v277, %v648
    %v650 = vand.u32 %v649, 4294901760
    %651 = vmatpush1.msra.mxu0 %v650
    %v652 = vand.u32 %v281, 4294901760
    %v653 = vsub.f32 %v281, %v652
    %v654 = vand.u32 %v653, 4294901760
    %655 = vmatprep.subr.mxu0 %v654
    %v656 = vand.u32 %v280, 4294901760
    %v657 = vsub.f32 %v280, %v656
    %v658 = vand.u32 %v657, 4294901760
    %659 = vmatpush1.msra.mxu0 %v658
    %660 = vmatprep.subr.mxu0 0.0
    %661 = vmatpush1.msra.mxu0 0.0
    %662 = vmatprep.subr.mxu0 0.0
    %663 = vmatpush1.msra.mxu0 0.0
    %664 = vmatprep.subr.mxu0 0.0
    %665 = vmatpush1.msra.mxu0 0.0
    %666 = vmatprep.subr.mxu0 0.0
    %667 = vmatpush1.msra.mxu0 0.0
    %668 = vmatprep.subr.mxu0 0.0
    %669 = vmatpush1.msra.mxu0 0.0
    %670 = vmatprep.subr.mxu0 0.0
    %671 = vmatpush1.msra.mxu0 0.0
    %672 = vmatprep.subr.mxu0 0.0
    %673 = vmatpush1.msra.mxu0 0.0
    %674 = vmatprep.subr.mxu0 0.0
    %675 = vmatpush1.msra.mxu0 0.0
    %676 = vmatprep.subr.mxu0 0.0
    %677 = vmatpush1.msra.mxu0 0.0
    %678 = vmatprep.subr.mxu0 0.0
    %679 = vmatpush1.msra.mxu0 0.0
    %680 = vmatprep.subr.mxu0 0.0
    %681 = vmatpush1.msra.mxu0 0.0
    %682 = vmatprep.subr.mxu0 0.0
    %683 = vmatpush1.msra.mxu0 0.0
    %684 = vmatprep.subr.mxu0 0.0
    %685 = vmatpush1.msra.mxu0 0.0
    %686 = vmatprep.subr.mxu0 0.0
    %687 = vmatpush1.msra.mxu0 0.0
    %688 = vmatprep.subr.mxu0 0.0
    %689 = vmatpush1.msra.mxu0 0.0
    %690 = vmatprep.subr.mxu0 0.0
    %691 = vmatpush1.msra.mxu0 0.0
    %692 = vmatprep.subr.mxu0 0.0
    %693 = vmatpush1.msra.mxu0 0.0
    %694 = vmatprep.subr.mxu0 0.0
    %695 = vmatpush1.msra.mxu0 0.0
    %696 = vmatprep.subr.mxu0 0.0
    %697 = vmatpush1.msra.mxu0 0.0
    %698 = vmatprep.subr.mxu0 0.0
    %699 = vmatpush1.msra.mxu0 0.0
    %700 = vmatprep.subr.mxu0 0.0
    %701 = vmatpush1.msra.mxu0 0.0
    %702 = vmatprep.subr.mxu0 0.0
    %703 = vmatpush1.msra.mxu0 0.0
    %704 = vmatprep.subr.mxu0 0.0
    %705 = vmatpush1.msra.mxu0 0.0
    %706 = vmatprep.subr.mxu0 0.0
    %707 = vmatpush1.msra.mxu0 0.0
    %708 = vmatprep.subr.mxu0 0.0
    %709 = vmatpush1.msra.mxu0 0.0
    %710 = vmatprep.subr.mxu0 0.0
    %711 = vmatpush1.msra.mxu0 0.0
    %712 = vmatprep.subr.mxu0 0.0
    %713 = vmatpush1.msra.mxu0 0.0
    %714 = vmatprep.subr.mxu0 0.0
    %715 = vmatpush1.msra.mxu0 0.0
    %716 = vmatprep.subr.mxu0 0.0
    %717 = vmatpush1.msra.mxu0 0.0
    %718 = vmatprep.mubr.f32.mxu0 0.0
    %v719 = vand.u32 %v285, 4294901760
    %720 = vmatmul.mubr.f32.gmra.mrb[0].mxu0 %v719
    %v721 = vpop.f32.mrb[0].mxu0
    %v722 = vadd.f32 %v632, %v721
    %v723 = vpop.f32.mrb[0].mxu0
    %v724 = vadd.f32 %v634, %v723
    %725 = vdwg.mxu0
    %v726 = vand.u32 %v275, 4294901760
    %727 = vmatprep.subr.mxu0 %v726
    %v728 = vand.u32 %v274, 4294901760
    %729 = vmatpush1.msra.mxu0 %v728
    %v730 = vand.u32 %v278, 4294901760
    %731 = vmatprep.subr.mxu0 %v730
    %v732 = vand.u32 %v277, 4294901760
    %733 = vmatpush1.msra.mxu0 %v732
    %v734 = vand.u32 %v281, 4294901760
    %735 = vmatprep.subr.mxu0 %v734
    %v736 = vand.u32 %v280, 4294901760
    %737 = vmatpush1.msra.mxu0 %v736
    %738 = vmatprep.subr.mxu0 0.0
    %739 = vmatpush1.msra.mxu0 0.0
    %740 = vmatprep.subr.mxu0 0.0
    %741 = vmatpush1.msra.mxu0 0.0
    %742 = vmatprep.subr.mxu0 0.0
    %743 = vmatpush1.msra.mxu0 0.0
    %744 = vmatprep.subr.mxu0 0.0
    %745 = vmatpush1.msra.mxu0 0.0
    %746 = vmatprep.subr.mxu0 0.0
    %747 = vmatpush1.msra.mxu0 0.0
    %748 = vmatprep.subr.mxu0 0.0
    %749 = vmatpush1.msra.mxu0 0.0
    %750 = vmatprep.subr.mxu0 0.0
    %751 = vmatpush1.msra.mxu0 0.0
    %752 = vmatprep.subr.mxu0 0.0
    %753 = vmatpush1.msra.mxu0 0.0
    %754 = vmatprep.subr.mxu0 0.0
    %755 = vmatpush1.msra.mxu0 0.0
    %756 = vmatprep.subr.mxu0 0.0
    %757 = vmatpush1.msra.mxu0 0.0
    %758 = vmatprep.subr.mxu0 0.0
    %759 = vmatpush1.msra.mxu0 0.0
    %760 = vmatprep.subr.mxu0 0.0
    %761 = vmatpush1.msra.mxu0 0.0
    %762 = vmatprep.subr.mxu0 0.0
    %763 = vmatpush1.msra.mxu0 0.0
    %764 = vmatprep.subr.mxu0 0.0
    %765 = vmatpush1.msra.mxu0 0.0
    %766 = vmatprep.subr.mxu0 0.0
    %767 = vmatpush1.msra.mxu0 0.0
    %768 = vmatprep.subr.mxu0 0.0
    %769 = vmatpush1.msra.mxu0 0.0
    %770 = vmatprep.subr.mxu0 0.0
    %771 = vmatpush1.msra.mxu0 0.0
    %772 = vmatprep.subr.mxu0 0.0
    %773 = vmatpush1.msra.mxu0 0.0
    %774 = vmatprep.subr.mxu0 0.0
    %775 = vmatpush1.msra.mxu0 0.0
    %776 = vmatprep.subr.mxu0 0.0
    %777 = vmatpush1.msra.mxu0 0.0
    %778 = vmatprep.subr.mxu0 0.0
    %779 = vmatpush1.msra.mxu0 0.0
    %780 = vmatprep.subr.mxu0 0.0
    %781 = vmatpush1.msra.mxu0 0.0
    %782 = vmatprep.subr.mxu0 0.0
    %783 = vmatpush1.msra.mxu0 0.0
    %784 = vmatprep.subr.mxu0 0.0
    %785 = vmatpush1.msra.mxu0 0.0
    %786 = vmatprep.subr.mxu0 0.0
    %787 = vmatpush1.msra.mxu0 0.0
    %788 = vmatprep.subr.mxu0 0.0
    %789 = vmatpush1.msra.mxu0 0.0
    %790 = vmatprep.subr.mxu0 0.0
    %791 = vmatpush1.msra.mxu0 0.0
    %792 = vmatprep.subr.mxu0 0.0
    %793 = vmatpush1.msra.mxu0 0.0
    %794 = vmatprep.subr.mxu0 0.0
    %795 = vmatpush1.msra.mxu0 0.0
    %796 = vmatprep.mubr.f32.mxu0 0.0
    %v797 = vand.u32 %v285, 4294901760
    %798 = vmatmul.mubr.f32.gmra.mrb[0].mxu0 %v797
    %v799 = vpop.f32.mrb[0].mxu0
    %v800 = vadd.f32 %v722, %v799
    %v801 = vpop.f32.mrb[0].mxu0
    %v802 = vadd.f32 %v724, %v801
    %803 = vdwg.mxu0
    %804 = vmatprep.subr.mxu0 0.0
    %v805 = vand.u32 %v276, 4294901760
    %806 = vmatpush1.msra.mxu0 %v805
    %807 = vmatprep.subr.mxu0 0.0
    %v808 = vand.u32 %v279, 4294901760
    %809 = vmatpush1.msra.mxu0 %v808
    %810 = vmatprep.subr.mxu0 0.0
    %v811 = vand.u32 %v282, 4294901760
    %812 = vmatpush1.msra.mxu0 %v811
    %813 = vmatprep.subr.mxu0 0.0
    %814 = vmatpush1.msra.mxu0 0.0
    %815 = vmatprep.subr.mxu0 0.0
    %816 = vmatpush1.msra.mxu0 0.0
    %817 = vmatprep.subr.mxu0 0.0
    %818 = vmatpush1.msra.mxu0 0.0
    %819 = vmatprep.subr.mxu0 0.0
    %820 = vmatpush1.msra.mxu0 0.0
    %821 = vmatprep.subr.mxu0 0.0
    %822 = vmatpush1.msra.mxu0 0.0
    %823 = vmatprep.subr.mxu0 0.0
    %824 = vmatpush1.msra.mxu0 0.0
    %825 = vmatprep.subr.mxu0 0.0
    %826 = vmatpush1.msra.mxu0 0.0
    %827 = vmatprep.subr.mxu0 0.0
    %828 = vmatpush1.msra.mxu0 0.0
    %829 = vmatprep.subr.mxu0 0.0
    %830 = vmatpush1.msra.mxu0 0.0
    %831 = vmatprep.subr.mxu0 0.0
    %832 = vmatpush1.msra.mxu0 0.0
    %833 = vmatprep.subr.mxu0 0.0
    %834 = vmatpush1.msra.mxu0 0.0
    %835 = vmatprep.subr.mxu0 0.0
    %836 = vmatpush1.msra.mxu0 0.0
    %837 = vmatprep.subr.mxu0 0.0
    %838 = vmatpush1.msra.mxu0 0.0
    %839 = vmatprep.subr.mxu0 0.0
    %840 = vmatpush1.msra.mxu0 0.0
    %841 = vmatprep.subr.mxu0 0.0
    %842 = vmatpush1.msra.mxu0 0.0
    %843 = vmatprep.subr.mxu0 0.0
    %844 = vmatpush1.msra.mxu0 0.0
    %845 = vmatprep.subr.mxu0 0.0
    %846 = vmatpush1.msra.mxu0 0.0
    %847 = vmatprep.subr.mxu0 0.0
    %848 = vmatpush1.msra.mxu0 0.0
    %849 = vmatprep.subr.mxu0 0.0
    %850 = vmatpush1.msra.mxu0 0.0
    %851 = vmatprep.subr.mxu0 0.0
    %852 = vmatpush1.msra.mxu0 0.0
    %853 = vmatprep.subr.mxu0 0.0
    %854 = vmatpush1.msra.mxu0 0.0
    %855 = vmatprep.subr.mxu0 0.0
    %856 = vmatpush1.msra.mxu0 0.0
    %857 = vmatprep.subr.mxu0 0.0
    %858 = vmatpush1.msra.mxu0 0.0
    %859 = vmatprep.subr.mxu0 0.0
    %860 = vmatpush1.msra.mxu0 0.0
    %861 = vmatprep.subr.mxu0 0.0
    %862 = vmatpush1.msra.mxu0 0.0
    %863 = vmatprep.subr.mxu0 0.0
    %864 = vmatpush1.msra.mxu0 0.0
    %865 = vmatprep.subr.mxu0 0.0
    %866 = vmatpush1.msra.mxu0 0.0
    %867 = vmatprep.subr.mxu0 0.0
    %868 = vmatpush1.msra.mxu0 0.0
    %869 = vmatprep.subr.mxu0 0.0
    %870 = vmatpush1.msra.mxu0 0.0
    %871 = vmatprep.mubr.f32.mxu0 0.0
    %v872 = vand.u32 %v285, 4294901760
    %v873 = vsub.f32 %v285, %v872
    %v874 = vand.u32 %v873, 4294901760
    %v875 = vsub.f32 %v873, %v874
    %v876 = vand.u32 %v875, 4294901760
    %877 = vmatmul.mubr.f32.gmra.mrb[0].mxu0 %v876
    %v878 = vpop.f32.mrb[0].mxu0
    %v879 = vadd.f32 0.0, %v878
    %v880 = vpop.f32.mrb[0].mxu0
    %881 = vdwg.mxu0
    %882 = vmatprep.subr.mxu0 0.0
    %v883 = vand.u32 %v276, 4294901760
    %v884 = vsub.f32 %v276, %v883
    %v885 = vand.u32 %v884, 4294901760
    %v886 = vsub.f32 %v884, %v885
    %v887 = vand.u32 %v886, 4294901760
    %888 = vmatpush1.msra.mxu0 %v887
    %889 = vmatprep.subr.mxu0 0.0
    %v890 = vand.u32 %v279, 4294901760
    %v891 = vsub.f32 %v279, %v890
    %v892 = vand.u32 %v891, 4294901760
    %v893 = vsub.f32 %v891, %v892
    %v894 = vand.u32 %v893, 4294901760
    %895 = vmatpush1.msra.mxu0 %v894
    %896 = vmatprep.subr.mxu0 0.0
    %v897 = vand.u32 %v282, 4294901760
    %v898 = vsub.f32 %v282, %v897
    %v899 = vand.u32 %v898, 4294901760
    %v900 = vsub.f32 %v898, %v899
    %v901 = vand.u32 %v900, 4294901760
    %902 = vmatpush1.msra.mxu0 %v901
    %903 = vmatprep.subr.mxu0 0.0
    %904 = vmatpush1.msra.mxu0 0.0
    %905 = vmatprep.subr.mxu0 0.0
    %906 = vmatpush1.msra.mxu0 0.0
    %907 = vmatprep.subr.mxu0 0.0
    %908 = vmatpush1.msra.mxu0 0.0
    %909 = vmatprep.subr.mxu0 0.0
    %910 = vmatpush1.msra.mxu0 0.0
    %911 = vmatprep.subr.mxu0 0.0
    %912 = vmatpush1.msra.mxu0 0.0
    %913 = vmatprep.subr.mxu0 0.0
    %914 = vmatpush1.msra.mxu0 0.0
    %915 = vmatprep.subr.mxu0 0.0
    %916 = vmatpush1.msra.mxu0 0.0
    %917 = vmatprep.subr.mxu0 0.0
    %918 = vmatpush1.msra.mxu0 0.0
    %919 = vmatprep.subr.mxu0 0.0
    %920 = vmatpush1.msra.mxu0 0.0
    %921 = vmatprep.subr.mxu0 0.0
    %922 = vmatpush1.msra.mxu0 0.0
    %923 = vmatprep.subr.mxu0 0.0
    %924 = vmatpush1.msra.mxu0 0.0
    %925 = vmatprep.subr.mxu0 0.0
    %926 = vmatpush1.msra.mxu0 0.0
    %927 = vmatprep.subr.mxu0 0.0
    %928 = vmatpush1.msra.mxu0 0.0
    %929 = vmatprep.subr.mxu0 0.0
    %930 = vmatpush1.msra.mxu0 0.0
    %931 = vmatprep.subr.mxu0 0.0
    %932 = vmatpush1.msra.mxu0 0.0
    %933 = vmatprep.subr.mxu0 0.0
    %934 = vmatpush1.msra.mxu0 0.0
    %935 = vmatprep.subr.mxu0 0.0
    %936 = vmatpush1.msra.mxu0 0.0
    %937 = vmatprep.subr.mxu0 0.0
    %938 = vmatpush1.msra.mxu0 0.0
    %939 = vmatprep.subr.mxu0 0.0
    %940 = vmatpush1.msra.mxu0 0.0
    %941 = vmatprep.subr.mxu0 0.0
    %942 = vmatpush1.msra.mxu0 0.0
    %943 = vmatprep.subr.mxu0 0.0
    %944 = vmatpush1.msra.mxu0 0.0
    %945 = vmatprep.subr.mxu0 0.0
    %946 = vmatpush1.msra.mxu0 0.0
    %947 = vmatprep.subr.mxu0 0.0
    %948 = vmatpush1.msra.mxu0 0.0
    %949 = vmatprep.subr.mxu0 0.0
    %950 = vmatpush1.msra.mxu0 0.0
    %951 = vmatprep.subr.mxu0 0.0
    %952 = vmatpush1.msra.mxu0 0.0
    %953 = vmatprep.subr.mxu0 0.0
    %954 = vmatpush1.msra.mxu0 0.0
    %955 = vmatprep.subr.mxu0 0.0
    %956 = vmatpush1.msra.mxu0 0.0
    %957 = vmatprep.subr.mxu0 0.0
    %958 = vmatpush1.msra.mxu0 0.0
    %959 = vmatprep.subr.mxu0 0.0
    %960 = vmatpush1.msra.mxu0 0.0
    %961 = vmatprep.mubr.f32.mxu0 0.0
    %v962 = vand.u32 %v285, 4294901760
    %963 = vmatmul.mubr.f32.gmra.mrb[0].mxu0 %v962
    %v964 = vpop.f32.mrb[0].mxu0
    %v965 = vadd.f32 %v879, %v964
    %v966 = vpop.f32.mrb[0].mxu0
    %967 = vdwg.mxu0
    %968 = vmatprep.subr.mxu0 0.0
    %v969 = vand.u32 %v276, 4294901760
    %v970 = vsub.f32 %v276, %v969
    %971 = vmatpush1.msra.mxu0 %v970
    %972 = vmatprep.subr.mxu0 0.0
    %v973 = vand.u32 %v279, 4294901760
    %v974 = vsub.f32 %v279, %v973
    %975 = vmatpush1.msra.mxu0 %v974
    %976 = vmatprep.subr.mxu0 0.0
    %v977 = vand.u32 %v282, 4294901760
    %v978 = vsub.f32 %v282, %v977
    %979 = vmatpush1.msra.mxu0 %v978
    %980 = vmatprep.subr.mxu0 0.0
    %981 = vmatpush1.msra.mxu0 0.0
    %982 = vmatprep.subr.mxu0 0.0
    %983 = vmatpush1.msra.mxu0 0.0
    %984 = vmatprep.subr.mxu0 0.0
    %985 = vmatpush1.msra.mxu0 0.0
    %986 = vmatprep.subr.mxu0 0.0
    %987 = vmatpush1.msra.mxu0 0.0
    %988 = vmatprep.subr.mxu0 0.0
    %989 = vmatpush1.msra.mxu0 0.0
    %990 = vmatprep.subr.mxu0 0.0
    %991 = vmatpush1.msra.mxu0 0.0
    %992 = vmatprep.subr.mxu0 0.0
    %993 = vmatpush1.msra.mxu0 0.0
    %994 = vmatprep.subr.mxu0 0.0
    %995 = vmatpush1.msra.mxu0 0.0
    %996 = vmatprep.subr.mxu0 0.0
    %997 = vmatpush1.msra.mxu0 0.0
    %998 = vmatprep.subr.mxu0 0.0
    %999 = vmatpush1.msra.mxu0 0.0
    %1000 = vmatprep.subr.mxu0 0.0
    %1001 = vmatpush1.msra.mxu0 0.0
    %1002 = vmatprep.subr.mxu0 0.0
    %1003 = vmatpush1.msra.mxu0 0.0
    %1004 = vmatprep.subr.mxu0 0.0
    %1005 = vmatpush1.msra.mxu0 0.0
    %1006 = vmatprep.subr.mxu0 0.0
    %1007 = vmatpush1.msra.mxu0 0.0
    %1008 = vmatprep.subr.mxu0 0.0
    %1009 = vmatpush1.msra.mxu0 0.0
    %1010 = vmatprep.subr.mxu0 0.0
    %1011 = vmatpush1.msra.mxu0 0.0
    %1012 = vmatprep.subr.mxu0 0.0
    %1013 = vmatpush1.msra.mxu0 0.0
    %1014 = vmatprep.subr.mxu0 0.0
    %1015 = vmatpush1.msra.mxu0 0.0
    %1016 = vmatprep.subr.mxu0 0.0
    %1017 = vmatpush1.msra.mxu0 0.0
    %1018 = vmatprep.subr.mxu0 0.0
    %1019 = vmatpush1.msra.mxu0 0.0
    %1020 = vmatprep.subr.mxu0 0.0
    %1021 = vmatpush1.msra.mxu0 0.0
    %1022 = vmatprep.subr.mxu0 0.0
    %1023 = vmatpush1.msra.mxu0 0.0
    %1024 = vmatprep.subr.mxu0 0.0
    %1025 = vmatpush1.msra.mxu0 0.0
    %1026 = vmatprep.subr.mxu0 0.0
    %1027 = vmatpush1.msra.mxu0 0.0
    %1028 = vmatprep.subr.mxu0 0.0
    %1029 = vmatpush1.msra.mxu0 0.0
    %1030 = vmatprep.subr.mxu0 0.0
    %1031 = vmatpush1.msra.mxu0 0.0
    %1032 = vmatprep.subr.mxu0 0.0
    %1033 = vmatpush1.msra.mxu0 0.0
    %1034 = vmatprep.subr.mxu0 0.0
    %1035 = vmatpush1.msra.mxu0 0.0
    %1036 = vmatprep.subr.mxu0 0.0
    %1037 = vmatpush1.msra.mxu0 0.0
    %1038 = vmatprep.mubr.f32.mxu0 0.0
    %v1039 = vand.u32 %v285, 4294901760
    %v1040 = vsub.f32 %v285, %v1039
    %1041 = vmatmul.mubr.f32.gmra.mrb[0].mxu0 %v1040
    %v1042 = vpop.f32.mrb[0].mxu0
    %v1043 = vadd.f32 %v965, %v1042
    %v1044 = vpop.f32.mrb[0].mxu0
    %1045 = vdwg.mxu0
    %1046 = vmatprep.subr.mxu0 0.0
    %v1047 = vand.u32 %v276, 4294901760
    %1048 = vmatpush1.msra.mxu0 %v1047
    %1049 = vmatprep.subr.mxu0 0.0
    %v1050 = vand.u32 %v279, 4294901760
    %1051 = vmatpush1.msra.mxu0 %v1050
    %1052 = vmatprep.subr.mxu0 0.0
    %v1053 = vand.u32 %v282, 4294901760
    %1054 = vmatpush1.msra.mxu0 %v1053
    %1055 = vmatprep.subr.mxu0 0.0
    %1056 = vmatpush1.msra.mxu0 0.0
    %1057 = vmatprep.subr.mxu0 0.0
    %1058 = vmatpush1.msra.mxu0 0.0
    %1059 = vmatprep.subr.mxu0 0.0
    %1060 = vmatpush1.msra.mxu0 0.0
    %1061 = vmatprep.subr.mxu0 0.0
    %1062 = vmatpush1.msra.mxu0 0.0
    %1063 = vmatprep.subr.mxu0 0.0
    %1064 = vmatpush1.msra.mxu0 0.0
    %1065 = vmatprep.subr.mxu0 0.0
    %1066 = vmatpush1.msra.mxu0 0.0
    %1067 = vmatprep.subr.mxu0 0.0
    %1068 = vmatpush1.msra.mxu0 0.0
    %1069 = vmatprep.subr.mxu0 0.0
    %1070 = vmatpush1.msra.mxu0 0.0
    %1071 = vmatprep.subr.mxu0 0.0
    %1072 = vmatpush1.msra.mxu0 0.0
    %1073 = vmatprep.subr.mxu0 0.0
    %1074 = vmatpush1.msra.mxu0 0.0
    %1075 = vmatprep.subr.mxu0 0.0
    %1076 = vmatpush1.msra.mxu0 0.0
    %1077 = vmatprep.subr.mxu0 0.0
    %1078 = vmatpush1.msra.mxu0 0.0
    %1079 = vmatprep.subr.mxu0 0.0
    %1080 = vmatpush1.msra.mxu0 0.0
    %1081 = vmatprep.subr.mxu0 0.0
    %1082 = vmatpush1.msra.mxu0 0.0
    %1083 = vmatprep.subr.mxu0 0.0
    %1084 = vmatpush1.msra.mxu0 0.0
    %1085 = vmatprep.subr.mxu0 0.0
    %1086 = vmatpush1.msra.mxu0 0.0
    %1087 = vmatprep.subr.mxu0 0.0
    %1088 = vmatpush1.msra.mxu0 0.0
    %1089 = vmatprep.subr.mxu0 0.0
    %1090 = vmatpush1.msra.mxu0 0.0
    %1091 = vmatprep.subr.mxu0 0.0
    %1092 = vmatpush1.msra.mxu0 0.0
    %1093 = vmatprep.subr.mxu0 0.0
    %1094 = vmatpush1.msra.mxu0 0.0
    %1095 = vmatprep.subr.mxu0 0.0
    %1096 = vmatpush1.msra.mxu0 0.0
    %1097 = vmatprep.subr.mxu0 0.0
    %1098 = vmatpush1.msra.mxu0 0.0
    %1099 = vmatprep.subr.mxu0 0.0
    %1100 = vmatpush1.msra.mxu0 0.0
    %1101 = vmatprep.subr.mxu0 0.0
    %1102 = vmatpush1.msra.mxu0 0.0
    %1103 = vmatprep.subr.mxu0 0.0
    %1104 = vmatpush1.msra.mxu0 0.0
    %1105 = vmatprep.subr.mxu0 0.0
    %1106 = vmatpush1.msra.mxu0 0.0
    %1107 = vmatprep.subr.mxu0 0.0
    %1108 = vmatpush1.msra.mxu0 0.0
    %1109 = vmatprep.subr.mxu0 0.0
    %1110 = vmatpush1.msra.mxu0 0.0
    %1111 = vmatprep.subr.mxu0 0.0
    %1112 = vmatpush1.msra.mxu0 0.0
    %1113 = vmatprep.mubr.f32.mxu0 0.0
    %v1114 = vand.u32 %v285, 4294901760
    %v1115 = vsub.f32 %v285, %v1114
    %v1116 = vand.u32 %v1115, 4294901760
    %1117 = vmatmul.mubr.f32.gmra.mrb[0].mxu0 %v1116
    %v1118 = vpop.f32.mrb[0].mxu0
    %v1119 = vadd.f32 %v1043, %v1118
    %v1120 = vpop.f32.mrb[0].mxu0
    %1121 = vdwg.mxu0
    %1122 = vmatprep.subr.mxu0 0.0
    %v1123 = vand.u32 %v276, 4294901760
    %v1124 = vsub.f32 %v276, %v1123
    %v1125 = vand.u32 %v1124, 4294901760
    %1126 = vmatpush1.msra.mxu0 %v1125
    %1127 = vmatprep.subr.mxu0 0.0
    %v1128 = vand.u32 %v279, 4294901760
    %v1129 = vsub.f32 %v279, %v1128
    %v1130 = vand.u32 %v1129, 4294901760
    %1131 = vmatpush1.msra.mxu0 %v1130
    %1132 = vmatprep.subr.mxu0 0.0
    %v1133 = vand.u32 %v282, 4294901760
    %v1134 = vsub.f32 %v282, %v1133
    %v1135 = vand.u32 %v1134, 4294901760
    %1136 = vmatpush1.msra.mxu0 %v1135
    %1137 = vmatprep.subr.mxu0 0.0
    %1138 = vmatpush1.msra.mxu0 0.0
    %1139 = vmatprep.subr.mxu0 0.0
    %1140 = vmatpush1.msra.mxu0 0.0
    %1141 = vmatprep.subr.mxu0 0.0
    %1142 = vmatpush1.msra.mxu0 0.0
    %1143 = vmatprep.subr.mxu0 0.0
    %1144 = vmatpush1.msra.mxu0 0.0
    %1145 = vmatprep.subr.mxu0 0.0
    %1146 = vmatpush1.msra.mxu0 0.0
    %1147 = vmatprep.subr.mxu0 0.0
    %1148 = vmatpush1.msra.mxu0 0.0
    %1149 = vmatprep.subr.mxu0 0.0
    %1150 = vmatpush1.msra.mxu0 0.0
    %1151 = vmatprep.subr.mxu0 0.0
    %1152 = vmatpush1.msra.mxu0 0.0
    %1153 = vmatprep.subr.mxu0 0.0
    %1154 = vmatpush1.msra.mxu0 0.0
    %1155 = vmatprep.subr.mxu0 0.0
    %1156 = vmatpush1.msra.mxu0 0.0
    %1157 = vmatprep.subr.mxu0 0.0
    %1158 = vmatpush1.msra.mxu0 0.0
    %1159 = vmatprep.subr.mxu0 0.0
    %1160 = vmatpush1.msra.mxu0 0.0
    %1161 = vmatprep.subr.mxu0 0.0
    %1162 = vmatpush1.msra.mxu0 0.0
    %1163 = vmatprep.subr.mxu0 0.0
    %1164 = vmatpush1.msra.mxu0 0.0
    %1165 = vmatprep.subr.mxu0 0.0
    %1166 = vmatpush1.msra.mxu0 0.0
    %1167 = vmatprep.subr.mxu0 0.0
    %1168 = vmatpush1.msra.mxu0 0.0
    %1169 = vmatprep.subr.mxu0 0.0
    %1170 = vmatpush1.msra.mxu0 0.0
    %1171 = vmatprep.subr.mxu0 0.0
    %1172 = vmatpush1.msra.mxu0 0.0
    %1173 = vmatprep.subr.mxu0 0.0
    %1174 = vmatpush1.msra.mxu0 0.0
    %1175 = vmatprep.subr.mxu0 0.0
    %1176 = vmatpush1.msra.mxu0 0.0
    %1177 = vmatprep.subr.mxu0 0.0
    %1178 = vmatpush1.msra.mxu0 0.0
    %1179 = vmatprep.subr.mxu0 0.0
    %1180 = vmatpush1.msra.mxu0 0.0
    %1181 = vmatprep.subr.mxu0 0.0
    %1182 = vmatpush1.msra.mxu0 0.0
    %1183 = vmatprep.subr.mxu0 0.0
    %1184 = vmatpush1.msra.mxu0 0.0
    %1185 = vmatprep.subr.mxu0 0.0
    %1186 = vmatpush1.msra.mxu0 0.0
    %1187 = vmatprep.subr.mxu0 0.0
    %1188 = vmatpush1.msra.mxu0 0.0
    %1189 = vmatprep.subr.mxu0 0.0
    %1190 = vmatpush1.msra.mxu0 0.0
    %1191 = vmatprep.subr.mxu0 0.0
    %1192 = vmatpush1.msra.mxu0 0.0
    %1193 = vmatprep.subr.mxu0 0.0
    %1194 = vmatpush1.msra.mxu0 0.0
    %1195 = vmatprep.mubr.f32.mxu0 0.0
    %v1196 = vand.u32 %v285, 4294901760
    %1197 = vmatmul.mubr.f32.gmra.mrb[0].mxu0 %v1196
    %v1198 = vpop.f32.mrb[0].mxu0
    %v1199 = vadd.f32 %v1119, %v1198
    %v1200 = vpop.f32.mrb[0].mxu0
    %1201 = vdwg.mxu0
    %1202 = vmatprep.subr.mxu0 0.0
    %v1203 = vand.u32 %v276, 4294901760
    %1204 = vmatpush1.msra.mxu0 %v1203
    %1205 = vmatprep.subr.mxu0 0.0
    %v1206 = vand.u32 %v279, 4294901760
    %1207 = vmatpush1.msra.mxu0 %v1206
    %1208 = vmatprep.subr.mxu0 0.0
    %v1209 = vand.u32 %v282, 4294901760
    %1210 = vmatpush1.msra.mxu0 %v1209
    %1211 = vmatprep.subr.mxu0 0.0
    %1212 = vmatpush1.msra.mxu0 0.0
    %1213 = vmatprep.subr.mxu0 0.0
    %1214 = vmatpush1.msra.mxu0 0.0
    %1215 = vmatprep.subr.mxu0 0.0
    %1216 = vmatpush1.msra.mxu0 0.0
    %1217 = vmatprep.subr.mxu0 0.0
    %1218 = vmatpush1.msra.mxu0 0.0
    %1219 = vmatprep.subr.mxu0 0.0
    %1220 = vmatpush1.msra.mxu0 0.0
    %1221 = vmatprep.subr.mxu0 0.0
    %1222 = vmatpush1.msra.mxu0 0.0
    %1223 = vmatprep.subr.mxu0 0.0
    %1224 = vmatpush1.msra.mxu0 0.0
    %1225 = vmatprep.subr.mxu0 0.0
    %1226 = vmatpush1.msra.mxu0 0.0
    %1227 = vmatprep.subr.mxu0 0.0
    %1228 = vmatpush1.msra.mxu0 0.0
    %1229 = vmatprep.subr.mxu0 0.0
    %1230 = vmatpush1.msra.mxu0 0.0
    %1231 = vmatprep.subr.mxu0 0.0
    %1232 = vmatpush1.msra.mxu0 0.0
    %1233 = vmatprep.subr.mxu0 0.0
    %1234 = vmatpush1.msra.mxu0 0.0
    %1235 = vmatprep.subr.mxu0 0.0
    %1236 = vmatpush1.msra.mxu0 0.0
    %1237 = vmatprep.subr.mxu0 0.0
    %1238 = vmatpush1.msra.mxu0 0.0
    %1239 = vmatprep.subr.mxu0 0.0
    %1240 = vmatpush1.msra.mxu0 0.0
    %1241 = vmatprep.subr.mxu0 0.0
    %1242 = vmatpush1.msra.mxu0 0.0
    %1243 = vmatprep.subr.mxu0 0.0
    %1244 = vmatpush1.msra.mxu0 0.0
    %1245 = vmatprep.subr.mxu0 0.0
    %1246 = vmatpush1.msra.mxu0 0.0
    %1247 = vmatprep.subr.mxu0 0.0
    %1248 = vmatpush1.msra.mxu0 0.0
    %1249 = vmatprep.subr.mxu0 0.0
    %1250 = vmatpush1.msra.mxu0 0.0
    %1251 = vmatprep.subr.mxu0 0.0
    %1252 = vmatpush1.msra.mxu0 0.0
    %1253 = vmatprep.subr.mxu0 0.0
    %1254 = vmatpush1.msra.mxu0 0.0
    %1255 = vmatprep.subr.mxu0 0.0
    %1256 = vmatpush1.msra.mxu0 0.0
    %1257 = vmatprep.subr.mxu0 0.0
    %1258 = vmatpush1.msra.mxu0 0.0
    %1259 = vmatprep.subr.mxu0 0.0
    %1260 = vmatpush1.msra.mxu0 0.0
    %1261 = vmatprep.subr.mxu0 0.0
    %1262 = vmatpush1.msra.mxu0 0.0
    %1263 = vmatprep.subr.mxu0 0.0
    %1264 = vmatpush1.msra.mxu0 0.0
    %1265 = vmatprep.subr.mxu0 0.0
    %1266 = vmatpush1.msra.mxu0 0.0
    %1267 = vmatprep.subr.mxu0 0.0
    %1268 = vmatpush1.msra.mxu0 0.0
    %1269 = vmatprep.mubr.f32.mxu0 0.0
    %v1270 = vand.u32 %v285, 4294901760
    %1271 = vmatmul.mubr.f32.gmra.mrb[0].mxu0 %v1270
    %v1272 = vpop.f32.mrb[0].mxu0
    %v1273 = vadd.f32 %v1199, %v1272
    %v1274 = vpop.f32.mrb[0].mxu0
    %1275 = vdwg.mxu0
    %v1279 = vcombine.low %v800, %v802
    %v1281 = vunpack.c.l.s4 1983009808
    %v1282 = vunpack.c.0.s8 %v1281
    %v1283 = vlaneseq
    %v1284 = vshrl.u32 %v1283, 7
    %v1285 = vsub.s32 %v1282, %v1284
    %v1286 = vrot.slane %v1279, %v1285
    %v1288 = vunpack.c.l.s4 1983009808
    %v1289 = vunpack.c.0.s8 %v1288
    %v1290 = vlaneseq
    %v1291 = vshrl.u32 %v1290, 7
    %v1292 = vsub.s32 %v1289, %v1291
    %v1293 = vrot.slane %v1273, %v1292
    %v1294 = vcombine.low %v1286, %v1293
    %1296 = vst [vmem:[#allocation7] sm:$0x3f] %v1294
    // Predicated region
    $region22: #{tpu_custom_call.1} parent=1 // pred_check
      _
    $region23: #{tpu_custom_call.1} parent=1 // pred_check_branch
      %1298 = sbr.rel (0) target = $region25
    $region24: #{tpu_custom_call.1} parent=1 // pred_region
      %s1300 = ssub.s32 96, 96
      %1301 = vsyncadd [#allocation4], %s1300
      %s1303 = sshll.u32 [#allocation7], 4
      %s1304 = int_to_ptr.vmem [resolvable:$true] %s1303
      %1306 = dma.vmem_to_hbm [thread:$0]  %s1304, 96, %s3, [#allocation4]
    $region25: #{tpu_custom_call.1} parent=1 // pred_fallthru
      _
    // Predicated region
    $region26: #{tpu_custom_call.1} parent=1 // pred_check
      _
    $region27: #{tpu_custom_call.1} parent=1 // pred_check_branch
      %1308 = sbr.rel (0) target = $region29
    $region28: #{tpu_custom_call.1} parent=1 // pred_region
      %1309 = dma.done [#allocation4], 96
    $region29: #{tpu_custom_call.1} parent=1 // pred_fallthru
      _
    %1310 = vsyncpa [#allocation3], 1
    %1311 = vsyncpa [#allocation6], 1
    %1312 = vsyncpa [#allocation4], 1

</llo_original>
